<compile_context>
chip_gen: v7x
topology: tpu7x:2x2x1
jax: 0.10.0
libtpu: 0.0.40
codegen_flags: <defaults>
</compile_context>

<pallas_src>
import math

import jax
import jax.numpy as jnp
from jax.experimental import pallas as pl
from jax.experimental.pallas import tpu as pltpu


# --------------------------------------------------------------------------
# Fused MHA kernel: QKV projection + per-head attention + output projection,
# one batch element per grid step.
# --------------------------------------------------------------------------
def _make_mha_kernel(num_heads, approx_softmax):
    def mha_kernel(x_ref, wqkv_ref, bqkv_ref, wo_ref, bo_ref, o_ref, ctx_ref):
        # x_ref:    (1, S, E)   compute_dtype
        # wqkv_ref: (E, 3E)     compute_dtype (Q rows pre-scaled)
        # bqkv_ref: (1, 3E)     f32           (Q part pre-scaled)
        # wo_ref:   (E, E)      compute_dtype (W_o^T)
        # bo_ref:   (1, E)      f32
        # o_ref:    (1, S, E)   x.dtype
        # ctx_ref:  (S, E)      f32 VMEM scratch (head-major context)
        S = x_ref.shape[1]
        E = x_ref.shape[2]
        H = num_heads
        D = E // H
        mxu_dtype = x_ref.dtype

        # ---- fused QKV projection: one (S, E) @ (E, 3E) MXU matmul ----
        x = x_ref[0]                                           # (S, E)
        qkv = jnp.dot(x, wqkv_ref[...],
                      preferred_element_type=jnp.float32)      # (S, 3E) f32
        qkv = qkv + bqkv_ref[...]                              # f32 bias add

        # ---- per-head attention (static unroll; q/k/v are lane slices) ----
        for h in range(H):
            lo = h * D
            qh = qkv[:, lo:lo + D].astype(mxu_dtype)           # (S, D)
            kh = qkv[:, E + lo:E + lo + D].astype(mxu_dtype)   # (S, D)
            vh = qkv[:, 2 * E + lo:2 * E + lo + D].astype(mxu_dtype)

            # scores (scale already folded into the Q projection weights)
            s = jnp.dot(qh, kh.T,
                        preferred_element_type=jnp.float32)    # (S, S) f32

            # numerically stable softmax, f32 math
            m = jnp.max(s, axis=-1, keepdims=True)
            e = jnp.exp(s - m)
            den = jnp.sum(e, axis=-1, keepdims=True)
            if approx_softmax:
                p = e * pl.reciprocal(den, approx=True)        # EUP slot
            else:
                p = e / den

            # context for this head -> head-major columns of ctx scratch
            ctx_ref[:, lo:lo + D] = jnp.dot(
                p.astype(mxu_dtype), vh,
                preferred_element_type=jnp.float32)            # (S, D) f32

        # ---- fused output projection: single (S, E) @ (E, E) matmul ----
        ctx = ctx_ref[...].astype(wo_ref.dtype)                # (S, E)
        out = jnp.dot(ctx, wo_ref[...],
                      preferred_element_type=jnp.float32)      # (S, E) f32
        out = out + bo_ref[...]

        # dropout(p=0.0) is identity
        o_ref[0] = out.astype(o_ref.dtype)

    return mha_kernel


# --------------------------------------------------------------------------
# Wrapper
# --------------------------------------------------------------------------
def multi_head_attention(x, w_qkv, b_qkv, w_o, b_o, num_heads,
                         compute_dtype=jnp.bfloat16, approx_softmax=True):
    """x: (B, S, E).  w_qkv: (3E, E), b_qkv: (3E,), w_o: (E, E), b_o: (E,)
    (PyTorch nn.Linear convention: y = x @ W.T + b)."""
    B, S, E = x.shape
    H = num_heads
    D = E // H
    scale = D ** (-0.5)

    # ---- one-off wrapper-side weight prep (plain XLA) ----
    # Fold the softmax scale into the Q rows of the QKV projection (exact).
    w_qkv_s = w_qkv.at[:E].multiply(scale)
    b_qkv_s = b_qkv.at[:E].multiply(scale)

    wqkv_t = jnp.transpose(w_qkv_s).astype(compute_dtype)      # (E, 3E)
    bqkv_2d = b_qkv_s.reshape(1, 3 * E).astype(jnp.float32)    # (1, 3E)
    wo_t = jnp.transpose(w_o).astype(compute_dtype)            # (E, E)
    bo_2d = b_o.reshape(1, E).astype(jnp.float32)              # (1, E)
    x_c = x.astype(compute_dtype)

    out = pl.pallas_call(
        _make_mha_kernel(H, approx_softmax),
        out_shape=jax.ShapeDtypeStruct((B, S, E), x.dtype),
        grid_spec=pltpu.PrefetchScalarGridSpec(
            num_scalar_prefetch=0,
            grid=(B,),
            in_specs=[
                pl.BlockSpec((1, S, E), lambda b: (b, 0, 0)),      # x
                pl.BlockSpec((E, 3 * E), lambda b: (0, 0)),        # W_qkv^T (scaled)
                pl.BlockSpec((1, 3 * E), lambda b: (0, 0)),        # b_qkv (scaled)
                pl.BlockSpec((E, E), lambda b: (0, 0)),            # W_o^T
                pl.BlockSpec((1, E), lambda b: (0, 0)),            # b_o
            ],
            out_specs=pl.BlockSpec((1, S, E), lambda b: (b, 0, 0)),
            scratch_shapes=[pltpu.VMEM((S, E), jnp.float32)],      # ctx scratch
        ),
        compiler_params=pltpu.CompilerParams(
            dimension_semantics=("parallel",)),                    # megacore / v7x
    )(x_c, wqkv_t, bqkv_2d, wo_t, bo_2d)

    return out


# --------------------------------------------------------------------------
# Plain-JAX reference (mirrors the PyTorch forward) for verification.
# --------------------------------------------------------------------------
def reference_mha(x, w_qkv, b_qkv, w_o, b_o, num_heads):
    B, S, E = x.shape
    D = E // num_heads
    qkv = x @ w_qkv.T + b_qkv                                  # (B, S, 3E)
    qkv = qkv.reshape(B, S, 3, num_heads, D)
    qkv = jnp.transpose(qkv, (2, 0, 3, 1, 4))                  # (3, B, H, S, D)
    q, k, v = qkv[0], qkv[1], qkv[2]
    scores = jnp.einsum("bhqd,bhkd->bhqk", q, k) * (D ** -0.5)
    weights = jax.nn.softmax(scores, axis=-1)
    out = jnp.einsum("bhqk,bhkd->bhqd", weights, v)            # (B, H, S, D)
    out = jnp.transpose(out, (0, 2, 1, 3)).reshape(B, S, E)
    return out @ w_o.T + b_o


if __name__ == "__main__":
    # small shapes consistent with the module
    batch, seq_len, embed_dim, num_heads = 2, 8, 32, 4

    key = jax.random.PRNGKey(0)
    kx, kw1, kb1, kw2, kb2 = jax.random.split(key, 5)

    x = jax.random.normal(kx, (batch, seq_len, embed_dim), dtype=jnp.float32)

    lim1 = 1.0 / math.sqrt(embed_dim)
    w_qkv = jax.random.uniform(kw1, (3 * embed_dim, embed_dim),
                               minval=-lim1, maxval=lim1, dtype=jnp.float32)
    b_qkv = jax.random.uniform(kb1, (3 * embed_dim,),
                               minval=-lim1, maxval=lim1, dtype=jnp.float32)
    w_o = jax.random.uniform(kw2, (embed_dim, embed_dim),
                             minval=-lim1, maxval=lim1, dtype=jnp.float32)
    b_o = jax.random.uniform(kb2, (embed_dim,),
                             minval=-lim1, maxval=lim1, dtype=jnp.float32)

    ref = reference_mha(x, w_qkv, b_qkv, w_o, b_o, num_heads)

    # Exact path: f32 MXU inputs, exact softmax division -> tight agreement.
    out_f32 = multi_head_attention(x, w_qkv, b_qkv, w_o, b_o, num_heads,
                                   compute_dtype=jnp.float32,
                                   approx_softmax=False)
    out_f32 = jax.block_until_ready(out_f32)
    assert out_f32.shape == (batch, seq_len, embed_dim)
    assert jnp.allclose(out_f32, ref, atol=1e-4, rtol=1e-4)

    # Fast path (default): bf16 MXU feeds + EUP approx reciprocal -> looser.
    out_fast = multi_head_attention(x, w_qkv, b_qkv, w_o, b_o, num_heads)
    out_fast = jax.block_until_ready(out_fast)
    assert out_fast.shape == (batch, seq_len, embed_dim)
    assert jnp.allclose(out_fast, ref, atol=5e-2, rtol=5e-2)

    print("KERNEL_OK")
</pallas_src>

<mosaic_0001>
module attributes {stable_mosaic.version = 11 : i64} {
  func.func @mha_kernel(%arg0: i32, %arg1: memref<1x8x32xf32, #tpu.memory_space<vmem>>, %arg2: memref<32x96xf32, #tpu.memory_space<vmem>>, %arg3: memref<1x96xf32, #tpu.memory_space<vmem>>, %arg4: memref<32x32xf32, #tpu.memory_space<vmem>>, %arg5: memref<1x32xf32, #tpu.memory_space<vmem>>, %arg6: memref<1x8x32xf32, #tpu.memory_space<vmem>>, %arg7: memref<8x32xf32, #tpu.memory_space<vmem>>) attributes {dimension_semantics = [#tpu.dimension_semantics<parallel>], iteration_bounds = array<i64: 2>, scalar_prefetch = 0 : i64, scratch_operands = 1 : i64, tpu.core_type = #tpu.core_type<tc>, window_params = [{transform_indices = @transform_0, window_bounds = array<i64: 1, 8, 32>}, {pipeline_mode = #tpu.pipeline_mode<synchronous>, transform_indices = @transform_1, window_bounds = array<i64: 32, 96>}, {pipeline_mode = #tpu.pipeline_mode<synchronous>, transform_indices = @transform_2, window_bounds = array<i64: 1, 96>}, {pipeline_mode = #tpu.pipeline_mode<synchronous>, transform_indices = @transform_3, window_bounds = array<i64: 32, 32>}, {pipeline_mode = #tpu.pipeline_mode<synchronous>, transform_indices = @transform_4, window_bounds = array<i64: 1, 32>}, {transform_indices = @transform_5, window_bounds = array<i64: 1, 8, 32>}]} {
    %c0 = arith.constant 0 : index
    %c0_0 = arith.constant 0 : index
    %c0_1 = arith.constant 0 : index
    %0 = vector.load %arg1[%c0, %c0_0, %c0_1] : memref<1x8x32xf32, #tpu.memory_space<vmem>>, vector<1x8x32xf32>
    %1 = vector.shape_cast %0 : vector<1x8x32xf32> to vector<8x32xf32>
    %c0_2 = arith.constant 0 : index
    %c0_3 = arith.constant 0 : index
    %2 = vector.load %arg2[%c0_2, %c0_3] : memref<32x96xf32, #tpu.memory_space<vmem>>, vector<32x96xf32>
    %cst = arith.constant dense<0.000000e+00> : vector<8x96xf32>
    %3 = tpu.matmul %1, %2, %cst {dimension_numbers = #tpu.dot_dimension_numbers<[1], [0], [0], [1], [0, 0, 1, 1], [], []>} : vector<8x32xf32>, vector<32x96xf32>, vector<8x96xf32> -> vector<8x96xf32>
    %c0_4 = arith.constant 0 : index
    %c0_5 = arith.constant 0 : index
    %4 = vector.load %arg3[%c0_4, %c0_5] : memref<1x96xf32, #tpu.memory_space<vmem>>, vector<1x96xf32>
    %5 = vector.broadcast %4 : vector<1x96xf32> to vector<8x96xf32>
    %6 = arith.addf %3, %5 : vector<8x96xf32>
    %7 = vector.extract_strided_slice %6 {offsets = [0, 0], sizes = [8, 8], strides = [1, 1]} : vector<8x96xf32> to vector<8x8xf32>
    %8 = vector.extract_strided_slice %6 {offsets = [0, 32], sizes = [8, 8], strides = [1, 1]} : vector<8x96xf32> to vector<8x8xf32>
    %9 = vector.extract_strided_slice %6 {offsets = [0, 64], sizes = [8, 8], strides = [1, 1]} : vector<8x96xf32> to vector<8x8xf32>
    %10 = tpu.transpose %8, [1, 0] : vector<8x8xf32> -> vector<8x8xf32>
    %cst_6 = arith.constant dense<0.000000e+00> : vector<8x8xf32>
    %11 = tpu.matmul %7, %10, %cst_6 {dimension_numbers = #tpu.dot_dimension_numbers<[1], [0], [0], [1], [0, 0, 1, 1], [], []>} : vector<8x8xf32>, vector<8x8xf32>, vector<8x8xf32> -> vector<8x8xf32>
    %cst_7 = arith.constant dense<0xFF800000> : vector<8xf32>
    %12 = vector.multi_reduction <maximumf>, %11, %cst_7 [1] : vector<8x8xf32> to vector<8xf32>
    %13 = vector.shape_cast %12 : vector<8xf32> to vector<8x1xf32>
    %14 = vector.broadcast %13 : vector<8x1xf32> to vector<8x8xf32>
    %15 = arith.subf %11, %14 : vector<8x8xf32>
    %16 = math.exp %15 : vector<8x8xf32>
    %cst_8 = arith.constant dense<0.000000e+00> : vector<8xf32>
    %17 = vector.multi_reduction <add>, %16, %cst_8 [1] : vector<8x8xf32> to vector<8xf32>
    %18 = vector.shape_cast %17 : vector<8xf32> to vector<8x1xf32>
    %19 = vector.broadcast %18 : vector<8x1xf32> to vector<8x8xf32>
    %20 = arith.divf %16, %19 : vector<8x8xf32>
    %cst_9 = arith.constant dense<0.000000e+00> : vector<8x8xf32>
    %21 = tpu.matmul %20, %9, %cst_9 {dimension_numbers = #tpu.dot_dimension_numbers<[1], [0], [0], [1], [0, 0, 1, 1], [], []>} : vector<8x8xf32>, vector<8x8xf32>, vector<8x8xf32> -> vector<8x8xf32>
    %c0_10 = arith.constant 0 : index
    %c0_11 = arith.constant 0 : index
    %22 = vector.load %arg7[%c0_10, %c0_11] : memref<8x32xf32, #tpu.memory_space<vmem>>, vector<8x8xf32>
    tpu.vector_store %arg7[%c0_10, %c0_11], %21 {strides = array<i32>} : memref<8x32xf32, #tpu.memory_space<vmem>>, vector<8x8xf32>,
    %23 = vector.extract_strided_slice %6 {offsets = [0, 8], sizes = [8, 8], strides = [1, 1]} : vector<8x96xf32> to vector<8x8xf32>
    %24 = vector.extract_strided_slice %6 {offsets = [0, 40], sizes = [8, 8], strides = [1, 1]} : vector<8x96xf32> to vector<8x8xf32>
    %25 = vector.extract_strided_slice %6 {offsets = [0, 72], sizes = [8, 8], strides = [1, 1]} : vector<8x96xf32> to vector<8x8xf32>
    %26 = tpu.transpose %24, [1, 0] : vector<8x8xf32> -> vector<8x8xf32>
    %cst_12 = arith.constant dense<0.000000e+00> : vector<8x8xf32>
    %27 = tpu.matmul %23, %26, %cst_12 {dimension_numbers = #tpu.dot_dimension_numbers<[1], [0], [0], [1], [0, 0, 1, 1], [], []>} : vector<8x8xf32>, vector<8x8xf32>, vector<8x8xf32> -> vector<8x8xf32>
    %cst_13 = arith.constant dense<0xFF800000> : vector<8xf32>
    %28 = vector.multi_reduction <maximumf>, %27, %cst_13 [1] : vector<8x8xf32> to vector<8xf32>
    %29 = vector.shape_cast %28 : vector<8xf32> to vector<8x1xf32>
    %30 = vector.broadcast %29 : vector<8x1xf32> to vector<8x8xf32>
    %31 = arith.subf %27, %30 : vector<8x8xf32>
    %32 = math.exp %31 : vector<8x8xf32>
    %cst_14 = arith.constant dense<0.000000e+00> : vector<8xf32>
    %33 = vector.multi_reduction <add>, %32, %cst_14 [1] : vector<8x8xf32> to vector<8xf32>
    %34 = vector.shape_cast %33 : vector<8xf32> to vector<8x1xf32>
    %35 = vector.broadcast %34 : vector<8x1xf32> to vector<8x8xf32>
    %36 = arith.divf %32, %35 : vector<8x8xf32>
    %cst_15 = arith.constant dense<0.000000e+00> : vector<8x8xf32>
    %37 = tpu.matmul %36, %25, %cst_15 {dimension_numbers = #tpu.dot_dimension_numbers<[1], [0], [0], [1], [0, 0, 1, 1], [], []>} : vector<8x8xf32>, vector<8x8xf32>, vector<8x8xf32> -> vector<8x8xf32>
    %c0_16 = arith.constant 0 : index
    %c8 = arith.constant 8 : index
    %38 = vector.load %arg7[%c0_16, %c8] : memref<8x32xf32, #tpu.memory_space<vmem>>, vector<8x8xf32>
    tpu.vector_store %arg7[%c0_16, %c8], %37 {strides = array<i32>} : memref<8x32xf32, #tpu.memory_space<vmem>>, vector<8x8xf32>,
    %39 = vector.extract_strided_slice %6 {offsets = [0, 16], sizes = [8, 8], strides = [1, 1]} : vector<8x96xf32> to vector<8x8xf32>
    %40 = vector.extract_strided_slice %6 {offsets = [0, 48], sizes = [8, 8], strides = [1, 1]} : vector<8x96xf32> to vector<8x8xf32>
    %41 = vector.extract_strided_slice %6 {offsets = [0, 80], sizes = [8, 8], strides = [1, 1]} : vector<8x96xf32> to vector<8x8xf32>
    %42 = tpu.transpose %40, [1, 0] : vector<8x8xf32> -> vector<8x8xf32>
    %cst_17 = arith.constant dense<0.000000e+00> : vector<8x8xf32>
    %43 = tpu.matmul %39, %42, %cst_17 {dimension_numbers = #tpu.dot_dimension_numbers<[1], [0], [0], [1], [0, 0, 1, 1], [], []>} : vector<8x8xf32>, vector<8x8xf32>, vector<8x8xf32> -> vector<8x8xf32>
    %cst_18 = arith.constant dense<0xFF800000> : vector<8xf32>
    %44 = vector.multi_reduction <maximumf>, %43, %cst_18 [1] : vector<8x8xf32> to vector<8xf32>
    %45 = vector.shape_cast %44 : vector<8xf32> to vector<8x1xf32>
    %46 = vector.broadcast %45 : vector<8x1xf32> to vector<8x8xf32>
    %47 = arith.subf %43, %46 : vector<8x8xf32>
    %48 = math.exp %47 : vector<8x8xf32>
    %cst_19 = arith.constant dense<0.000000e+00> : vector<8xf32>
    %49 = vector.multi_reduction <add>, %48, %cst_19 [1] : vector<8x8xf32> to vector<8xf32>
    %50 = vector.shape_cast %49 : vector<8xf32> to vector<8x1xf32>
    %51 = vector.broadcast %50 : vector<8x1xf32> to vector<8x8xf32>
    %52 = arith.divf %48, %51 : vector<8x8xf32>
    %cst_20 = arith.constant dense<0.000000e+00> : vector<8x8xf32>
    %53 = tpu.matmul %52, %41, %cst_20 {dimension_numbers = #tpu.dot_dimension_numbers<[1], [0], [0], [1], [0, 0, 1, 1], [], []>} : vector<8x8xf32>, vector<8x8xf32>, vector<8x8xf32> -> vector<8x8xf32>
    %c0_21 = arith.constant 0 : index
    %c16 = arith.constant 16 : index
    %54 = vector.load %arg7[%c0_21, %c16] : memref<8x32xf32, #tpu.memory_space<vmem>>, vector<8x8xf32>
    tpu.vector_store %arg7[%c0_21, %c16], %53 {strides = array<i32>} : memref<8x32xf32, #tpu.memory_space<vmem>>, vector<8x8xf32>,
    %55 = vector.extract_strided_slice %6 {offsets = [0, 24], sizes = [8, 8], strides = [1, 1]} : vector<8x96xf32> to vector<8x8xf32>
    %56 = vector.extract_strided_slice %6 {offsets = [0, 56], sizes = [8, 8], strides = [1, 1]} : vector<8x96xf32> to vector<8x8xf32>
    %57 = vector.extract_strided_slice %6 {offsets = [0, 88], sizes = [8, 8], strides = [1, 1]} : vector<8x96xf32> to vector<8x8xf32>
    %58 = tpu.transpose %56, [1, 0] : vector<8x8xf32> -> vector<8x8xf32>
    %cst_22 = arith.constant dense<0.000000e+00> : vector<8x8xf32>
    %59 = tpu.matmul %55, %58, %cst_22 {dimension_numbers = #tpu.dot_dimension_numbers<[1], [0], [0], [1], [0, 0, 1, 1], [], []>} : vector<8x8xf32>, vector<8x8xf32>, vector<8x8xf32> -> vector<8x8xf32>
    %cst_23 = arith.constant dense<0xFF800000> : vector<8xf32>
    %60 = vector.multi_reduction <maximumf>, %59, %cst_23 [1] : vector<8x8xf32> to vector<8xf32>
    %61 = vector.shape_cast %60 : vector<8xf32> to vector<8x1xf32>
    %62 = vector.broadcast %61 : vector<8x1xf32> to vector<8x8xf32>
    %63 = arith.subf %59, %62 : vector<8x8xf32>
    %64 = math.exp %63 : vector<8x8xf32>
    %cst_24 = arith.constant dense<0.000000e+00> : vector<8xf32>
    %65 = vector.multi_reduction <add>, %64, %cst_24 [1] : vector<8x8xf32> to vector<8xf32>
    %66 = vector.shape_cast %65 : vector<8xf32> to vector<8x1xf32>
    %67 = vector.broadcast %66 : vector<8x1xf32> to vector<8x8xf32>
    %68 = arith.divf %64, %67 : vector<8x8xf32>
    %cst_25 = arith.constant dense<0.000000e+00> : vector<8x8xf32>
    %69 = tpu.matmul %68, %57, %cst_25 {dimension_numbers = #tpu.dot_dimension_numbers<[1], [0], [0], [1], [0, 0, 1, 1], [], []>} : vector<8x8xf32>, vector<8x8xf32>, vector<8x8xf32> -> vector<8x8xf32>
    %c0_26 = arith.constant 0 : index
    %c24 = arith.constant 24 : index
    %70 = vector.load %arg7[%c0_26, %c24] : memref<8x32xf32, #tpu.memory_space<vmem>>, vector<8x8xf32>
    tpu.vector_store %arg7[%c0_26, %c24], %69 {strides = array<i32>} : memref<8x32xf32, #tpu.memory_space<vmem>>, vector<8x8xf32>,
    %c0_27 = arith.constant 0 : index
    %c0_28 = arith.constant 0 : index
    %71 = vector.load %arg7[%c0_27, %c0_28] : memref<8x32xf32, #tpu.memory_space<vmem>>, vector<8x32xf32>
    %c0_29 = arith.constant 0 : index
    %c0_30 = arith.constant 0 : index
    %72 = vector.load %arg4[%c0_29, %c0_30] : memref<32x32xf32, #tpu.memory_space<vmem>>, vector<32x32xf32>
    %cst_31 = arith.constant dense<0.000000e+00> : vector<8x32xf32>
    %73 = tpu.matmul %71, %72, %cst_31 {dimension_numbers = #tpu.dot_dimension_numbers<[1], [0], [0], [1], [0, 0, 1, 1], [], []>} : vector<8x32xf32>, vector<32x32xf32>, vector<8x32xf32> -> vector<8x32xf32>
    %c0_32 = arith.constant 0 : index
    %c0_33 = arith.constant 0 : index
    %74 = vector.load %arg5[%c0_32, %c0_33] : memref<1x32xf32, #tpu.memory_space<vmem>>, vector<1x32xf32>
    %75 = vector.broadcast %74 : vector<1x32xf32> to vector<8x32xf32>
    %76 = arith.addf %73, %75 : vector<8x32xf32>
    %c0_34 = arith.constant 0 : index
    %c0_35 = arith.constant 0 : index
    %c0_36 = arith.constant 0 : index
    %77 = vector.load %arg6[%c0_34, %c0_35, %c0_36] : memref<1x8x32xf32, #tpu.memory_space<vmem>>, vector<1x8x32xf32>
    %78 = vector.shape_cast %77 : vector<1x8x32xf32> to vector<8x32xf32>
    %79 = vector.shape_cast %76 : vector<8x32xf32> to vector<1x8x32xf32>
    tpu.vector_store %arg6[%c0_34, %c0_35, %c0_36], %79 {strides = array<i32>} : memref<1x8x32xf32, #tpu.memory_space<vmem>>, vector<1x8x32xf32>,
    return
  }
  func.func @transform_0(%arg0: i32) -> (i32, i32, i32) {
    %c0_i32 = arith.constant 0 : i32
    %c0_i32_0 = arith.constant 0 : i32
    %c0_i32_1 = arith.constant 0 : i32
    return %arg0, %c0_i32, %c0_i32_0 : i32, i32, i32
  }
  func.func @transform_1(%arg0: i32) -> (i32, i32) {
    %c0_i32 = arith.constant 0 : i32
    %c0_i32_0 = arith.constant 0 : i32
    %c0_i32_1 = arith.constant 0 : i32
    return %c0_i32, %c0_i32_0 : i32, i32
  }
  func.func @transform_2(%arg0: i32) -> (i32, i32) {
    %c0_i32 = arith.constant 0 : i32
    %c0_i32_0 = arith.constant 0 : i32
    %c0_i32_1 = arith.constant 0 : i32
    return %c0_i32, %c0_i32_0 : i32, i32
  }
  func.func @transform_3(%arg0: i32) -> (i32, i32) {
    %c0_i32 = arith.constant 0 : i32
    %c0_i32_0 = arith.constant 0 : i32
    %c0_i32_1 = arith.constant 0 : i32
    return %c0_i32, %c0_i32_0 : i32, i32
  }
  func.func @transform_4(%arg0: i32) -> (i32, i32) {
    %c0_i32 = arith.constant 0 : i32
    %c0_i32_0 = arith.constant 0 : i32
    %c0_i32_1 = arith.constant 0 : i32
    return %c0_i32, %c0_i32_0 : i32, i32
  }
  func.func @transform_5(%arg0: i32) -> (i32, i32, i32) {
    %c0_i32 = arith.constant 0 : i32
    %c0_i32_0 = arith.constant 0 : i32
    %c0_i32_1 = arith.constant 0 : i32
    return %arg0, %c0_i32, %c0_i32_0 : i32, i32, i32
  }
}

</mosaic_0001>

<llo_original>
// kernel: tpu_custom_call.1
$region0: #{tpu_custom_call.1}
  #allocation0 [shape = 'u32[]', space=smem, size = 0x4, offset = 0x4, fixed_abs, tag = 'smem constant byte address 0x4 - core index']
  #allocation1 [shape = 'u32[144,128]{1,0:T(1,128)}', space=vmem, size = 0x12000, scoped, tag = 'internal scratch']
  #allocation2 [shape = 'f32[8,32]{1,0:T(8,128)}', space=vmem, size = 0x1000, scoped, tag = 'scratch operand']
  %s0 = inlined_call_operand.hbm [shape: f32[2,8,32], index: 0, kind: input, shape index: {}]
  %s1 = inlined_call_operand.hbm [shape: f32[32,96], index: 1, kind: input, shape index: {}]
  %s2 = inlined_call_operand.vmem [shape: f32[1,96], index: 2, kind: input, shape index: {}]
  %s3 = inlined_call_operand.hbm [shape: f32[32,32], index: 3, kind: input, shape index: {}]
  %s4 = inlined_call_operand.vmem [shape: f32[1,32], index: 4, kind: input, shape index: {}]
  %s5 = inlined_call_operand.hbm [shape: f32[2,8,32], index: 5, kind: output, shape index: {}]
  %s6 = sld [smem:[#allocation0]]
  $region65: #{tpu_custom_call.1} parent=0
    _
  %s8 = ssub.s32 1, %s6
  %s9 = scalar_select 0, %s8, %s6
  $region1: #{tpu_custom_call.1} parent=0
    #allocation3 [shape = 'u8[8192]{0}', space=vmem, size = 0x2000, scoped, tag = 'input window, operand 0']
    #allocation4 [shape = 's32[2]{0}', space=sflag, size = 0x8, scoped, tag = 'scoped memory for tpu_custom_call.1']
    #allocation5 [shape = 's32[2]{0}', space=sflag, size = 0x8, scoped, tag = 'scoped memory for tpu_custom_call.1']
    #allocation6 [shape = 'u8[16384]{0}', space=vmem, size = 0x4000, scoped, tag = 'input window, operand 1, single buffered']
    #allocation7 [shape = 's32[1]{0}', space=sflag, size = 0x4, scoped, tag = 'scoped memory for tpu_custom_call.1']
    #allocation8 [shape = 'u8[16384]{0}', space=vmem, size = 0x4000, scoped, tag = 'input window, operand 3, single buffered']
    #allocation9 [shape = 'u8[8192]{0}', space=vmem, size = 0x2000, scoped, tag = 'output window, operand 0']
    %10 = vsyncpa [#allocation4], 0
    %s11 = scalar_lea.sflag [#allocation4], 1
    %12 = vsyncpa %s11, 0
    %13 = vsyncpa [#allocation7], 0
    %14 = vsyncpa [#allocation5], 0
    %s15 = scalar_lea.sflag [#allocation5], 1
    %16 = vsyncpa %s15, 0
    loop: start=0, step=1, limit=4
    $region2: #{tpu_custom_call.1} parent=1 // loop_pre_header
      _
    $region3: #{tpu_custom_call.1} parent=1 // loop_header
      %s18 = sphi 0, %s22
      %p19 = scmp.ge.s32.totalorder %s18, 4
      %s28 = sphi 0, %s30
      %s31 = sphi 0, %s28
      %s32 = sphi 0, %s31
      %s48 = sphi 0, %s32
      %s52 = sphi 0, %s52
      %s54 = sphi 0, %s52
      %s55 = sphi 0, %s54
      %s69 = sphi 0, %s55
      %s73 = sphi 0, %s73
      %s75 = sphi 0, %s73
      %s76 = sphi 0, %s75
      %s90 = sphi 0, %s76
      %s94 = sphi 0, %s94
      %s96 = sphi 0, %s94
      %s97 = sphi 0, %s96
      %s111 = sphi 0, %s97
      %s115 = sphi 0, %s115
      %s117 = sphi 0, %s115
      %s118 = sphi 0, %s117
      %s132 = sphi 0, %s118
      %s138 = sphi 0, %s140
      %s141 = sphi 0, %s138
      %s142 = sphi 0, %s141
      %s158 = sphi 0, %s142
    $region4: #{tpu_custom_call.1} parent=1 // loop_header_branch
      %21 = sbr.rel (%p19) target = $region8
    $region5: #{tpu_custom_call.1} parent=1 // loop_body
      %s23 = ssub.s32 %s18, 1
      %s24 = ssub.s32 %s18, 2
      %s25 = sadd.s32 %s18, 1
      %s26 = ssub.s32 %s18, %s25
      %p27 = scmp.eq.s32.totalorder %s26, 0
      %s29 = sadd.s32 %s28, 1
      %s30 = scalar_select %p27, %s28, %s29
      %p33 = pneg %p27
      %p34 = scmp.eq.s32.totalorder %s18, 1
      %p35 = por %p33, %p34
      %p36 = scmp.ne.s32.totalorder %s28, %s31
      %p37 = scmp.eq.s32.totalorder %s18, 0
      %p38 = por %p36, %p37
      %p39 = scmp.ne.s32.totalorder %s28, %s31
      %p40 = scmp.eq.s32.totalorder %s23, 1
      %p41 = por %p39, %p40
      %p42 = scmp.ne.s32.totalorder %s31, %s32
      %p43 = scmp.eq.s32.totalorder %s23, 0
      %p44 = por %p42, %p43
      %p45 = scmp.ne.s32.totalorder %s31, %s32
      %p46 = scmp.eq.s32.totalorder %s24, 1
      %p47 = por %p45, %p46
      %p49 = scmp.ne.s32.totalorder %s32, %s48
      %p50 = scmp.eq.s32.totalorder %s24, 0
      %p51 = por %p49, %p50
      %s53 = sadd.s32 %s52, 1
      %p56 = scmp.eq.s32.totalorder %s18, 1
      %p57 = scmp.ne.s32.totalorder %s52, %s54
      %p58 = scmp.eq.s32.totalorder %s18, 0
      %p59 = por %p57, %p58
      %p60 = scmp.ne.s32.totalorder %s52, %s54
      %p61 = scmp.eq.s32.totalorder %s23, 1
      %p62 = por %p60, %p61
      %p63 = scmp.ne.s32.totalorder %s54, %s55
      %p64 = scmp.eq.s32.totalorder %s23, 0
      %p65 = por %p63, %p64
      %p66 = scmp.ne.s32.totalorder %s54, %s55
      %p67 = scmp.eq.s32.totalorder %s24, 1
      %p68 = por %p66, %p67
      %p70 = scmp.ne.s32.totalorder %s55, %s69
      %p71 = scmp.eq.s32.totalorder %s24, 0
      %p72 = por %p70, %p71
      %s74 = sadd.s32 %s73, 1
      %p77 = scmp.eq.s32.totalorder %s18, 1
      %p78 = scmp.ne.s32.totalorder %s73, %s75
      %p79 = scmp.eq.s32.totalorder %s18, 0
      %p80 = por %p78, %p79
      %p81 = scmp.ne.s32.totalorder %s73, %s75
      %p82 = scmp.eq.s32.totalorder %s23, 1
      %p83 = por %p81, %p82
      %p84 = scmp.ne.s32.totalorder %s75, %s76
      %p85 = scmp.eq.s32.totalorder %s23, 0
      %p86 = por %p84, %p85
      %p87 = scmp.ne.s32.totalorder %s75, %s76
      %p88 = scmp.eq.s32.totalorder %s24, 1
      %p89 = por %p87, %p88
      %p91 = scmp.ne.s32.totalorder %s76, %s90
      %p92 = scmp.eq.s32.totalorder %s24, 0
      %p93 = por %p91, %p92
      %s95 = sadd.s32 %s94, 1
      %p98 = scmp.eq.s32.totalorder %s18, 1
      %p99 = scmp.ne.s32.totalorder %s94, %s96
      %p100 = scmp.eq.s32.totalorder %s18, 0
      %p101 = por %p99, %p100
      %p102 = scmp.ne.s32.totalorder %s94, %s96
      %p103 = scmp.eq.s32.totalorder %s23, 1
      %p104 = por %p102, %p103
      %p105 = scmp.ne.s32.totalorder %s96, %s97
      %p106 = scmp.eq.s32.totalorder %s23, 0
      %p107 = por %p105, %p106
      %p108 = scmp.ne.s32.totalorder %s96, %s97
      %p109 = scmp.eq.s32.totalorder %s24, 1
      %p110 = por %p108, %p109
      %p112 = scmp.ne.s32.totalorder %s97, %s111
      %p113 = scmp.eq.s32.totalorder %s24, 0
      %p114 = por %p112, %p113
      %s116 = sadd.s32 %s115, 1
      %p119 = scmp.eq.s32.totalorder %s18, 1
      %p120 = scmp.ne.s32.totalorder %s115, %s117
      %p121 = scmp.eq.s32.totalorder %s18, 0
      %p122 = por %p120, %p121
      %p123 = scmp.ne.s32.totalorder %s115, %s117
      %p124 = scmp.eq.s32.totalorder %s23, 1
      %p125 = por %p123, %p124
      %p126 = scmp.ne.s32.totalorder %s117, %s118
      %p127 = scmp.eq.s32.totalorder %s23, 0
      %p128 = por %p126, %p127
      %p129 = scmp.ne.s32.totalorder %s117, %s118
      %p130 = scmp.eq.s32.totalorder %s24, 1
      %p131 = por %p129, %p130
      %p133 = scmp.ne.s32.totalorder %s118, %s132
      %p134 = scmp.eq.s32.totalorder %s24, 0
      %p135 = por %p133, %p134
      %s136 = ssub.s32 %s18, %s25
      %p137 = scmp.eq.s32.totalorder %s136, 0
      %s139 = sadd.s32 %s138, 1
      %s140 = scalar_select %p137, %s138, %s139
      %p143 = pneg %p137
      %p144 = scmp.eq.s32.totalorder %s18, 1
      %p145 = por %p143, %p144
      %p146 = scmp.ne.s32.totalorder %s138, %s141
      %p147 = scmp.eq.s32.totalorder %s18, 0
      %p148 = por %p146, %p147
      %p149 = scmp.ne.s32.totalorder %s138, %s141
      %p150 = scmp.eq.s32.totalorder %s23, 1
      %p151 = por %p149, %p150
      %p152 = scmp.ne.s32.totalorder %s141, %s142
      %p153 = scmp.eq.s32.totalorder %s23, 0
      %p154 = por %p152, %p153
      %p155 = scmp.ne.s32.totalorder %s141, %s142
      %p156 = scmp.eq.s32.totalorder %s24, 1
      %p157 = por %p155, %p156
      %p159 = scmp.ne.s32.totalorder %s142, %s158
      %p160 = scmp.eq.s32.totalorder %s24, 0
      %p161 = por %p159, %p160
      %p162 = scmp.le.s32.totalorder 1, %s18
      %p163 = scmp.lt.s32.totalorder %s18, 3
      %p164 = pnand %p162, %p163
      %p165 = pneg %p164
      // Predicated region
      $region9: #{tpu_custom_call.1} parent=5 // pred_check
        _
      $region10: #{tpu_custom_call.1} parent=5 // pred_check_branch
        %167 = sbr.rel (%p164) target = $region12
      $region11: #{tpu_custom_call.1} parent=5 // pred_region
        %s168 = ssub.s32 %s18, 1
        // Predicated region
        $region13: #{tpu_custom_call.1} parent=11 // pred_check
          %p169 = pneg %p65
        $region14: #{tpu_custom_call.1} parent=11 // pred_check_branch
          %171 = sbr.rel (%p169) target = $region16
        $region15: #{tpu_custom_call.1} parent=11 // pred_region
          %s173 = ssub.s32 512, 512
          %174 = vsyncadd [#allocation7], %s173
          %s175 = sshll.u32 [#allocation6], 4
          %s176 = int_to_ptr.vmem [resolvable:$true] %s175
          %181 = dma.hbm_to_vmem [thread:$0]  %s1, 512, %s176, [#allocation7], 128, 128, 8
        $region16: #{tpu_custom_call.1} parent=11 // pred_fallthru
          _
        // Predicated region
        $region17: #{tpu_custom_call.1} parent=11 // pred_check
          %p182 = pneg %p86
        $region18: #{tpu_custom_call.1} parent=11 // pred_check_branch
          %184 = sbr.rel (%p182) target = $region20
        $region19: #{tpu_custom_call.1} parent=11 // pred_region
          _
        $region20: #{tpu_custom_call.1} parent=11 // pred_fallthru
          _
        // Predicated region
        $region21: #{tpu_custom_call.1} parent=11 // pred_check
          %p185 = pneg %p107
        $region22: #{tpu_custom_call.1} parent=11 // pred_check_branch
          %187 = sbr.rel (%p185) target = $region24
        $region23: #{tpu_custom_call.1} parent=11 // pred_region
          %s189 = ssub.s32 512, 512
          %190 = vsyncadd [#allocation7], %s189
          %s191 = sshll.u32 [#allocation8], 4
          %s192 = int_to_ptr.vmem [resolvable:$true] %s191
          %197 = dma.hbm_to_vmem [thread:$0]  %s3, 512, %s192, [#allocation7], 128, 128, 8
        $region24: #{tpu_custom_call.1} parent=11 // pred_fallthru
          _
        // Predicated region
        $region25: #{tpu_custom_call.1} parent=11 // pred_check
          %p198 = pneg %p128
        $region26: #{tpu_custom_call.1} parent=11 // pred_check_branch
          %200 = sbr.rel (%p198) target = $region28
        $region27: #{tpu_custom_call.1} parent=11 // pred_region
          _
        $region28: #{tpu_custom_call.1} parent=11 // pred_fallthru
          _
      $region12: #{tpu_custom_call.1} parent=5 // pred_fallthru
        _
      %p201 = scmp.lt.s32.totalorder %s18, 2
      // Predicated region
      $region29: #{tpu_custom_call.1} parent=5 // pred_check
        %p202 = pneg %p201
      $region30: #{tpu_custom_call.1} parent=5 // pred_check_branch
        %204 = sbr.rel (%p202) target = $region32
      $region31: #{tpu_custom_call.1} parent=5 // pred_region
        // Predicated region
        $region33: #{tpu_custom_call.1} parent=31 // pred_check
          %p205 = pneg %p38
        $region34: #{tpu_custom_call.1} parent=31 // pred_check_branch
          %207 = sbr.rel (%p205) target = $region36
        $region35: #{tpu_custom_call.1} parent=31 // pred_region
          %s208 = sand.u32 %s28, 1
          %s209 = scalar_lea.sflag [#allocation4], %s208
          %s210 = sand.u32 %s28, 1
          %s211 = smul.addr %s210, 8
          %s212 = scalar_lea.vmem [#allocation3], %s211
          %s214 = ssub.s32 128, 128
          %215 = vsyncadd %s209, %s214
          %s216 = smul.addr %s18, 128
          %s217 = scalar_lea.hbm %s0, %s216
          %s219 = sshll.u32 %s212, 4
          %s220 = int_to_ptr.vmem [resolvable:$true] %s219
          %222 = dma.hbm_to_vmem [thread:$0]  %s217, 128, %s220, %s209
        $region36: #{tpu_custom_call.1} parent=31 // pred_fallthru
          _
      $region32: #{tpu_custom_call.1} parent=5 // pred_fallthru
        _
      %p223 = scmp.le.s32.totalorder 1, %s18
      %p224 = scmp.lt.s32.totalorder %s18, 3
      %p225 = pnand %p223, %p224
      %p226 = pneg %p225
      // Predicated region
      $region37: #{tpu_custom_call.1} parent=5 // pred_check
        _
      $region38: #{tpu_custom_call.1} parent=5 // pred_check_branch
        %228 = sbr.rel (%p225) target = $region40
      $region39: #{tpu_custom_call.1} parent=5 // pred_region
        %s229 = ssub.s32 %s18, 1
        %s230 = sand.u32 %s31, 1
        %s231 = scalar_lea.sflag [#allocation4], %s230
        %s232 = sand.u32 %s31, 1
        %s233 = smul.addr %s232, 8
        %s234 = scalar_lea.vmem [#allocation3], %s233
        // Predicated region
        $region41: #{tpu_custom_call.1} parent=39 // pred_check
          %p235 = pneg %p44
        $region42: #{tpu_custom_call.1} parent=39 // pred_check_branch
          %237 = sbr.rel (%p235) target = $region44
        $region43: #{tpu_custom_call.1} parent=39 // pred_region
          %238 = dma.done %s231, 128
        $region44: #{tpu_custom_call.1} parent=39 // pred_fallthru
          _
        // Predicated region
        $region45: #{tpu_custom_call.1} parent=39 // pred_check
          %p239 = pneg %p65
        $region46: #{tpu_custom_call.1} parent=39 // pred_check_branch
          %241 = sbr.rel (%p239) target = $region48
        $region47: #{tpu_custom_call.1} parent=39 // pred_region
          %242 = dma.done [#allocation7], 512
        $region48: #{tpu_custom_call.1} parent=39 // pred_fallthru
          _
        // Predicated region
        $region49: #{tpu_custom_call.1} parent=39 // pred_check
          %p243 = pneg %p107
        $region50: #{tpu_custom_call.1} parent=39 // pred_check_branch
          %245 = sbr.rel (%p243) target = $region52
        $region51: #{tpu_custom_call.1} parent=39 // pred_region
          %246 = dma.done [#allocation7], 512
        $region52: #{tpu_custom_call.1} parent=39 // pred_fallthru
          _
        %s247 = sand.u32 %s31, 1
        %s248 = scalar_lea.sflag [#allocation4], %s247
        %s249 = sand.u32 %s31, 1
        %s250 = smul.addr %s249, 8
        %s251 = scalar_lea.vmem [#allocation3], %s250
        %p252 = pneg %p44
        %p253 = pneg %p41
        %p254 = pneg %p65
        %p255 = pneg %p62
        %p256 = pneg %p86
        %p257 = pneg %p83
        %p258 = pneg %p107
        %p259 = pneg %p104
        %p260 = pneg %p128
        %p261 = pneg %p125
        %p262 = pneg %p154
        %p263 = pneg %p151
        %s264 = sand.u32 %s141, 1
        %s265 = scalar_lea.sflag [#allocation5], %s264
        %s266 = sand.u32 %s141, 1
        %s267 = smul.addr %s266, 8
        %s268 = scalar_lea.vmem [#allocation9], %s267
        %v269 = vld [vmem:[%s234] sm:$0xff]
        %v270 = vld [vmem:[#allocation6] sm:$0xff]
        %v271 = vld [vmem:[#allocation6 + $0x8] sm:$0xff]
        %v272 = vld [vmem:[#allocation6 + $0x10] sm:$0xff]
        %v273 = vld [vmem:[#allocation6 + $0x18] sm:$0xff]
        %v274 = vld [vmem:[%s2] sm:$0x1]
        %v276 = vlaneseq
        %v277 = vshrl.u32 %v276, 7
        %v278 = vsub.s32 0, %v277
        %v279 = vrot.slane %v274, %v278
        %vm281 = vcmask 261120
        %v283 = vsel %vm281, %v269, 0
        %285 = vmatprep.subr.mxu0 0.0
        %286 = vmatpush1.msra.mxu0 %v270
        %287 = vmatprep.subr.mxu0 0.0
        %288 = vmatpush1.msra.mxu0 %v271
        %289 = vmatprep.subr.mxu0 0.0
        %290 = vmatpush1.msra.mxu0 %v272
        %291 = vmatprep.subr.mxu0 0.0
        %292 = vmatpush1.msra.mxu0 %v273
        %293 = vmatprep.subr.mxu0 0.0
        %294 = vmatpush1.msra.mxu0 0.0
        %295 = vmatprep.subr.mxu0 0.0
        %296 = vmatpush1.msra.mxu0 0.0
        %297 = vmatprep.subr.mxu0 0.0
        %298 = vmatpush1.msra.mxu0 0.0
        %299 = vmatprep.subr.mxu0 0.0
        %300 = vmatpush1.msra.mxu0 0.0
        %301 = vmatprep.subr.mxu0 0.0
        %302 = vmatpush1.msra.mxu0 0.0
        %303 = vmatprep.subr.mxu0 0.0
        %304 = vmatpush1.msra.mxu0 0.0
        %305 = vmatprep.subr.mxu0 0.0
        %306 = vmatpush1.msra.mxu0 0.0
        %307 = vmatprep.subr.mxu0 0.0
        %308 = vmatpush1.msra.mxu0 0.0
        %309 = vmatprep.subr.mxu0 0.0
        %310 = vmatpush1.msra.mxu0 0.0
        %311 = vmatprep.subr.mxu0 0.0
        %312 = vmatpush1.msra.mxu0 0.0
        %313 = vmatprep.subr.mxu0 0.0
        %314 = vmatpush1.msra.mxu0 0.0
        %315 = vmatprep.subr.mxu0 0.0
        %316 = vmatpush1.msra.mxu0 0.0
        %317 = vmatprep.subr.mxu0 0.0
        %318 = vmatpush1.msra.mxu0 0.0
        %319 = vmatprep.subr.mxu0 0.0
        %320 = vmatpush1.msra.mxu0 0.0
        %321 = vmatprep.subr.mxu0 0.0
        %322 = vmatpush1.msra.mxu0 0.0
        %323 = vmatprep.subr.mxu0 0.0
        %324 = vmatpush1.msra.mxu0 0.0
        %325 = vmatprep.subr.mxu0 0.0
        %326 = vmatpush1.msra.mxu0 0.0
        %327 = vmatprep.subr.mxu0 0.0
        %328 = vmatpush1.msra.mxu0 0.0
        %329 = vmatprep.subr.mxu0 0.0
        %330 = vmatpush1.msra.mxu0 0.0
        %331 = vmatprep.subr.mxu0 0.0
        %332 = vmatpush1.msra.mxu0 0.0
        %333 = vmatprep.subr.mxu0 0.0
        %334 = vmatpush1.msra.mxu0 0.0
        %335 = vmatprep.subr.mxu0 0.0
        %336 = vmatpush1.msra.mxu0 0.0
        %337 = vmatprep.subr.mxu0 0.0
        %338 = vmatpush1.msra.mxu0 0.0
        %339 = vmatprep.subr.mxu0 0.0
        %340 = vmatpush1.msra.mxu0 0.0
        %341 = vmatprep.subr.mxu0 0.0
        %342 = vmatpush1.msra.mxu0 0.0
        %343 = vmatprep.subr.mxu0 0.0
        %344 = vmatpush1.msra.mxu0 0.0
        %345 = vmatprep.subr.mxu0 0.0
        %346 = vmatpush1.msra.mxu0 0.0
        %347 = vmatprep.subr.mxu0 0.0
        %348 = vmatpush1.msra.mxu0 0.0
        %349 = vmatprep.mubr.f32.mxu0 0.0
        %350 = vmatmul.mubr.f32.gmra.mrb[0].mxu0 %v283
        %v351 = vpop.f32.mrb[0].mxu0
        %v352 = vadd.f32 %v279, %v351
        %v353 = vpop.f32.mrb[0].mxu0
        %354 = vdwg.mxu0
        %356 = vrot.lane.b32.xlu0 %v352, 96
        %v357 = vpop.permute.xlu0 %356
        %vm358 = vcmask 64512
        %v359 = vsel %vm358, %v352, 0
        %v361 = vsel %vm358, %v357, 0
        %363 = vmatprep.subr.mxu0 0.0
        %364 = vmatpush1.xpose.msra.mxu0 %v361
        %365 = vmatprep.subr.mxu0 0.0
        %366 = vmatpush1.xpose.msra.mxu0 0.0
        %367 = vmatprep.subr.mxu0 0.0
        %368 = vmatpush1.xpose.msra.mxu0 0.0
        %369 = vmatprep.subr.mxu0 0.0
        %370 = vmatpush1.xpose.msra.mxu0 0.0
        %371 = vmatprep.subr.mxu0 0.0
        %372 = vmatpush1.xpose.msra.mxu0 0.0
        %373 = vmatprep.subr.mxu0 0.0
        %374 = vmatpush1.xpose.msra.mxu0 0.0
        %375 = vmatprep.subr.mxu0 0.0
        %376 = vmatpush1.xpose.msra.mxu0 0.0
        %377 = vmatprep.subr.mxu0 0.0
        %378 = vmatpush1.xpose.msra.mxu0 0.0
        %379 = vmatprep.subr.mxu0 0.0
        %380 = vmatpush1.xpose.msra.mxu0 0.0
        %381 = vmatprep.subr.mxu0 0.0
        %382 = vmatpush1.xpose.msra.mxu0 0.0
        %383 = vmatprep.subr.mxu0 0.0
        %384 = vmatpush1.xpose.msra.mxu0 0.0
        %385 = vmatprep.subr.mxu0 0.0
        %386 = vmatpush1.xpose.msra.mxu0 0.0
        %387 = vmatprep.subr.mxu0 0.0
        %388 = vmatpush1.xpose.msra.mxu0 0.0
        %389 = vmatprep.subr.mxu0 0.0
        %390 = vmatpush1.xpose.msra.mxu0 0.0
        %391 = vmatprep.subr.mxu0 0.0
        %392 = vmatpush1.xpose.msra.mxu0 0.0
        %393 = vmatprep.subr.mxu0 0.0
        %394 = vmatpush1.xpose.msra.mxu0 0.0
        %395 = vmatprep.subr.mxu0 0.0
        %396 = vmatpush1.xpose.msra.mxu0 0.0
        %397 = vmatprep.subr.mxu0 0.0
        %398 = vmatpush1.xpose.msra.mxu0 0.0
        %399 = vmatprep.subr.mxu0 0.0
        %400 = vmatpush1.xpose.msra.mxu0 0.0
        %401 = vmatprep.subr.mxu0 0.0
        %402 = vmatpush1.xpose.msra.mxu0 0.0
        %403 = vmatprep.subr.mxu0 0.0
        %404 = vmatpush1.xpose.msra.mxu0 0.0
        %405 = vmatprep.subr.mxu0 0.0
        %406 = vmatpush1.xpose.msra.mxu0 0.0
        %407 = vmatprep.subr.mxu0 0.0
        %408 = vmatpush1.xpose.msra.mxu0 0.0
        %409 = vmatprep.subr.mxu0 0.0
        %410 = vmatpush1.xpose.msra.mxu0 0.0
        %411 = vmatprep.subr.mxu0 0.0
        %412 = vmatpush1.xpose.msra.mxu0 0.0
        %413 = vmatprep.subr.mxu0 0.0
        %414 = vmatpush1.xpose.msra.mxu0 0.0
        %415 = vmatprep.subr.mxu0 0.0
        %416 = vmatpush1.xpose.msra.mxu0 0.0
        %417 = vmatprep.subr.mxu0 0.0
        %418 = vmatpush1.xpose.msra.mxu0 0.0
        %419 = vmatprep.subr.mxu0 0.0
        %420 = vmatpush1.xpose.msra.mxu0 0.0
        %421 = vmatprep.subr.mxu0 0.0
        %422 = vmatpush1.xpose.msra.mxu0 0.0
        %423 = vmatprep.subr.mxu0 0.0
        %424 = vmatpush1.xpose.msra.mxu0 0.0
        %425 = vmatprep.subr.mxu0 0.0
        %426 = vmatpush1.xpose.msra.mxu0 0.0
        %427 = vmatprep.mubr.f32.mxu0 0.0
        %428 = vmatmul.mubr.f32.gmra.mrb[0].mxu0 %v359
        %v429 = vpop.f32.mrb[0].mxu0
        %v430 = vadd.f32 0.0, %v429
        %v431 = vpop.f32.mrb[0].mxu0
        %432 = vdwg.mxu0
        %v433 = vsel %vm358, %v430, -inf
        %434 = vmax.xlane.f32.xlu0 %v433
        %v435 = vpop.xlane.xlu0 %434
        %v436 = vsub.f32 %v430, %v435
        %v437 = vmul.f32 %v436, 1.442695
        %v438 = vpow.pop %v437
        %v439 = vsel %vm358, %v438, 0.0
        %440 = vadd.xlane.f32.xlu0 %v439
        %v441 = vpop.xlane.xlu0 %440
        %v442 = vrcp.pop %v441
        %v443 = vmul.f32 %v438, %v442
        %444 = vrot.lane.b32.xlu0 %v352, 64
        %v445 = vpop.permute.xlu0 %444
        %v448 = vsel %vm358, %v443, 0
        %450 = vmatprep.subr.mxu0 0.0
        %451 = vmatpush1.msra.mxu0 %v445
        %452 = vmatprep.subr.mxu0 0.0
        %453 = vmatpush1.msra.mxu0 0.0
        %454 = vmatprep.subr.mxu0 0.0
        %455 = vmatpush1.msra.mxu0 0.0
        %456 = vmatprep.subr.mxu0 0.0
        %457 = vmatpush1.msra.mxu0 0.0
        %458 = vmatprep.subr.mxu0 0.0
        %459 = vmatpush1.msra.mxu0 0.0
        %460 = vmatprep.subr.mxu0 0.0
        %461 = vmatpush1.msra.mxu0 0.0
        %462 = vmatprep.subr.mxu0 0.0
        %463 = vmatpush1.msra.mxu0 0.0
        %464 = vmatprep.subr.mxu0 0.0
        %465 = vmatpush1.msra.mxu0 0.0
        %466 = vmatprep.subr.mxu0 0.0
        %467 = vmatpush1.msra.mxu0 0.0
        %468 = vmatprep.subr.mxu0 0.0
        %469 = vmatpush1.msra.mxu0 0.0
        %470 = vmatprep.subr.mxu0 0.0
        %471 = vmatpush1.msra.mxu0 0.0
        %472 = vmatprep.subr.mxu0 0.0
        %473 = vmatpush1.msra.mxu0 0.0
        %474 = vmatprep.subr.mxu0 0.0
        %475 = vmatpush1.msra.mxu0 0.0
        %476 = vmatprep.subr.mxu0 0.0
        %477 = vmatpush1.msra.mxu0 0.0
        %478 = vmatprep.subr.mxu0 0.0
        %479 = vmatpush1.msra.mxu0 0.0
        %480 = vmatprep.subr.mxu0 0.0
        %481 = vmatpush1.msra.mxu0 0.0
        %482 = vmatprep.subr.mxu0 0.0
        %483 = vmatpush1.msra.mxu0 0.0
        %484 = vmatprep.subr.mxu0 0.0
        %485 = vmatpush1.msra.mxu0 0.0
        %486 = vmatprep.subr.mxu0 0.0
        %487 = vmatpush1.msra.mxu0 0.0
        %488 = vmatprep.subr.mxu0 0.0
        %489 = vmatpush1.msra.mxu0 0.0
        %490 = vmatprep.subr.mxu0 0.0
        %491 = vmatpush1.msra.mxu0 0.0
        %492 = vmatprep.subr.mxu0 0.0
        %493 = vmatpush1.msra.mxu0 0.0
        %494 = vmatprep.subr.mxu0 0.0
        %495 = vmatpush1.msra.mxu0 0.0
        %496 = vmatprep.subr.mxu0 0.0
        %497 = vmatpush1.msra.mxu0 0.0
        %498 = vmatprep.subr.mxu0 0.0
        %499 = vmatpush1.msra.mxu0 0.0
        %500 = vmatprep.subr.mxu0 0.0
        %501 = vmatpush1.msra.mxu0 0.0
        %502 = vmatprep.subr.mxu0 0.0
        %503 = vmatpush1.msra.mxu0 0.0
        %504 = vmatprep.subr.mxu0 0.0
        %505 = vmatpush1.msra.mxu0 0.0
        %506 = vmatprep.subr.mxu0 0.0
        %507 = vmatpush1.msra.mxu0 0.0
        %508 = vmatprep.subr.mxu0 0.0
        %509 = vmatpush1.msra.mxu0 0.0
        %510 = vmatprep.subr.mxu0 0.0
        %511 = vmatpush1.msra.mxu0 0.0
        %512 = vmatprep.subr.mxu0 0.0
        %513 = vmatpush1.msra.mxu0 0.0
        %514 = vmatprep.mubr.f32.mxu0 0.0
        %515 = vmatmul.mubr.f32.gmra.mrb[0].mxu0 %v448
        %v516 = vpop.f32.mrb[0].mxu0
        %v517 = vadd.f32 0.0, %v516
        %v518 = vpop.f32.mrb[0].mxu0
        %519 = vdwg.mxu0
        %520 = vst.msk [vmem:[#allocation2] sm:$0xff] %vm358, %v517
        %521 = vrot.lane.b32.xlu0 %v352, 120
        %v522 = vpop.permute.xlu0 %521
        %523 = vrot.lane.b32.xlu0 %v352, 88
        %v524 = vpop.permute.xlu0 %523
        %v525 = vsel %vm358, %v522, 0
        %v527 = vsel %vm358, %v524, 0
        %529 = vmatprep.subr.mxu0 0.0
        %530 = vmatpush1.xpose.msra.mxu0 %v527
        %531 = vmatprep.subr.mxu0 0.0
        %532 = vmatpush1.xpose.msra.mxu0 0.0
        %533 = vmatprep.subr.mxu0 0.0
        %534 = vmatpush1.xpose.msra.mxu0 0.0
        %535 = vmatprep.subr.mxu0 0.0
        %536 = vmatpush1.xpose.msra.mxu0 0.0
        %537 = vmatprep.subr.mxu0 0.0
        %538 = vmatpush1.xpose.msra.mxu0 0.0
        %539 = vmatprep.subr.mxu0 0.0
        %540 = vmatpush1.xpose.msra.mxu0 0.0
        %541 = vmatprep.subr.mxu0 0.0
        %542 = vmatpush1.xpose.msra.mxu0 0.0
        %543 = vmatprep.subr.mxu0 0.0
        %544 = vmatpush1.xpose.msra.mxu0 0.0
        %545 = vmatprep.subr.mxu0 0.0
        %546 = vmatpush1.xpose.msra.mxu0 0.0
        %547 = vmatprep.subr.mxu0 0.0
        %548 = vmatpush1.xpose.msra.mxu0 0.0
        %549 = vmatprep.subr.mxu0 0.0
        %550 = vmatpush1.xpose.msra.mxu0 0.0
        %551 = vmatprep.subr.mxu0 0.0
        %552 = vmatpush1.xpose.msra.mxu0 0.0
        %553 = vmatprep.subr.mxu0 0.0
        %554 = vmatpush1.xpose.msra.mxu0 0.0
        %555 = vmatprep.subr.mxu0 0.0
        %556 = vmatpush1.xpose.msra.mxu0 0.0
        %557 = vmatprep.subr.mxu0 0.0
        %558 = vmatpush1.xpose.msra.mxu0 0.0
        %559 = vmatprep.subr.mxu0 0.0
        %560 = vmatpush1.xpose.msra.mxu0 0.0
        %561 = vmatprep.subr.mxu0 0.0
        %562 = vmatpush1.xpose.msra.mxu0 0.0
        %563 = vmatprep.subr.mxu0 0.0
        %564 = vmatpush1.xpose.msra.mxu0 0.0
        %565 = vmatprep.subr.mxu0 0.0
        %566 = vmatpush1.xpose.msra.mxu0 0.0
        %567 = vmatprep.subr.mxu0 0.0
        %568 = vmatpush1.xpose.msra.mxu0 0.0
        %569 = vmatprep.subr.mxu0 0.0
        %570 = vmatpush1.xpose.msra.mxu0 0.0
        %571 = vmatprep.subr.mxu0 0.0
        %572 = vmatpush1.xpose.msra.mxu0 0.0
        %573 = vmatprep.subr.mxu0 0.0
        %574 = vmatpush1.xpose.msra.mxu0 0.0
        %575 = vmatprep.subr.mxu0 0.0
        %576 = vmatpush1.xpose.msra.mxu0 0.0
        %577 = vmatprep.subr.mxu0 0.0
        %578 = vmatpush1.xpose.msra.mxu0 0.0
        %579 = vmatprep.subr.mxu0 0.0
        %580 = vmatpush1.xpose.msra.mxu0 0.0
        %581 = vmatprep.subr.mxu0 0.0
        %582 = vmatpush1.xpose.msra.mxu0 0.0
        %583 = vmatprep.subr.mxu0 0.0
        %584 = vmatpush1.xpose.msra.mxu0 0.0
        %585 = vmatprep.subr.mxu0 0.0
        %586 = vmatpush1.xpose.msra.mxu0 0.0
        %587 = vmatprep.subr.mxu0 0.0
        %588 = vmatpush1.xpose.msra.mxu0 0.0
        %589 = vmatprep.subr.mxu0 0.0
        %590 = vmatpush1.xpose.msra.mxu0 0.0
        %591 = vmatprep.subr.mxu0 0.0
        %592 = vmatpush1.xpose.msra.mxu0 0.0
        %593 = vmatprep.mubr.f32.mxu0 0.0
        %594 = vmatmul.mubr.f32.gmra.mrb[0].mxu0 %v525
        %v595 = vpop.f32.mrb[0].mxu0
        %v596 = vadd.f32 0.0, %v595
        %v597 = vpop.f32.mrb[0].mxu0
        %598 = vdwg.mxu0
        %v599 = vsel %vm358, %v596, -inf
        %600 = vmax.xlane.f32.xlu0 %v599
        %v601 = vpop.xlane.xlu0 %600
        %v602 = vsub.f32 %v596, %v601
        %v603 = vmul.f32 %v602, 1.442695
        %v604 = vpow.pop %v603
        %v605 = vsel %vm358, %v604, 0.0
        %606 = vadd.xlane.f32.xlu0 %v605
        %v607 = vpop.xlane.xlu0 %606
        %v608 = vrcp.pop %v607
        %v609 = vmul.f32 %v604, %v608
        %610 = vrot.lane.b32.xlu0 %v352, 56
        %v611 = vpop.permute.xlu0 %610
        %v614 = vsel %vm358, %v609, 0
        %616 = vmatprep.subr.mxu0 0.0
        %617 = vmatpush1.msra.mxu0 %v611
        %618 = vmatprep.subr.mxu0 0.0
        %619 = vmatpush1.msra.mxu0 0.0
        %620 = vmatprep.subr.mxu0 0.0
        %621 = vmatpush1.msra.mxu0 0.0
        %622 = vmatprep.subr.mxu0 0.0
        %623 = vmatpush1.msra.mxu0 0.0
        %624 = vmatprep.subr.mxu0 0.0
        %625 = vmatpush1.msra.mxu0 0.0
        %626 = vmatprep.subr.mxu0 0.0
        %627 = vmatpush1.msra.mxu0 0.0
        %628 = vmatprep.subr.mxu0 0.0
        %629 = vmatpush1.msra.mxu0 0.0
        %630 = vmatprep.subr.mxu0 0.0
        %631 = vmatpush1.msra.mxu0 0.0
        %632 = vmatprep.subr.mxu0 0.0
        %633 = vmatpush1.msra.mxu0 0.0
        %634 = vmatprep.subr.mxu0 0.0
        %635 = vmatpush1.msra.mxu0 0.0
        %636 = vmatprep.subr.mxu0 0.0
        %637 = vmatpush1.msra.mxu0 0.0
        %638 = vmatprep.subr.mxu0 0.0
        %639 = vmatpush1.msra.mxu0 0.0
        %640 = vmatprep.subr.mxu0 0.0
        %641 = vmatpush1.msra.mxu0 0.0
        %642 = vmatprep.subr.mxu0 0.0
        %643 = vmatpush1.msra.mxu0 0.0
        %644 = vmatprep.subr.mxu0 0.0
        %645 = vmatpush1.msra.mxu0 0.0
        %646 = vmatprep.subr.mxu0 0.0
        %647 = vmatpush1.msra.mxu0 0.0
        %648 = vmatprep.subr.mxu0 0.0
        %649 = vmatpush1.msra.mxu0 0.0
        %650 = vmatprep.subr.mxu0 0.0
        %651 = vmatpush1.msra.mxu0 0.0
        %652 = vmatprep.subr.mxu0 0.0
        %653 = vmatpush1.msra.mxu0 0.0
        %654 = vmatprep.subr.mxu0 0.0
        %655 = vmatpush1.msra.mxu0 0.0
        %656 = vmatprep.subr.mxu0 0.0
        %657 = vmatpush1.msra.mxu0 0.0
        %658 = vmatprep.subr.mxu0 0.0
        %659 = vmatpush1.msra.mxu0 0.0
        %660 = vmatprep.subr.mxu0 0.0
        %661 = vmatpush1.msra.mxu0 0.0
        %662 = vmatprep.subr.mxu0 0.0
        %663 = vmatpush1.msra.mxu0 0.0
        %664 = vmatprep.subr.mxu0 0.0
        %665 = vmatpush1.msra.mxu0 0.0
        %666 = vmatprep.subr.mxu0 0.0
        %667 = vmatpush1.msra.mxu0 0.0
        %668 = vmatprep.subr.mxu0 0.0
        %669 = vmatpush1.msra.mxu0 0.0
        %670 = vmatprep.subr.mxu0 0.0
        %671 = vmatpush1.msra.mxu0 0.0
        %672 = vmatprep.subr.mxu0 0.0
        %673 = vmatpush1.msra.mxu0 0.0
        %674 = vmatprep.subr.mxu0 0.0
        %675 = vmatpush1.msra.mxu0 0.0
        %676 = vmatprep.subr.mxu0 0.0
        %677 = vmatpush1.msra.mxu0 0.0
        %678 = vmatprep.subr.mxu0 0.0
        %679 = vmatpush1.msra.mxu0 0.0
        %680 = vmatprep.mubr.f32.mxu0 0.0
        %681 = vmatmul.mubr.f32.gmra.mrb[0].mxu0 %v614
        %v682 = vpop.f32.mrb[0].mxu0
        %v683 = vadd.f32 0.0, %v682
        %v684 = vpop.f32.mrb[0].mxu0
        %685 = vdwg.mxu0
        %687 = vrot.lane.b32.xlu0 %v683, 8
        %v688 = vpop.permute.xlu0 %687
        %vm690 = vcmask 130112
        %691 = vst.msk [vmem:[#allocation2] sm:$0xff] %vm690, %v688
        %692 = vrot.lane.b32.xlu0 %v352, 112
        %v693 = vpop.permute.xlu0 %692
        %694 = vrot.lane.b32.xlu0 %v352, 80
        %v695 = vpop.permute.xlu0 %694
        %v696 = vsel %vm358, %v693, 0
        %v698 = vsel %vm358, %v695, 0
        %700 = vmatprep.subr.mxu0 0.0
        %701 = vmatpush1.xpose.msra.mxu0 %v698
        %702 = vmatprep.subr.mxu0 0.0
        %703 = vmatpush1.xpose.msra.mxu0 0.0
        %704 = vmatprep.subr.mxu0 0.0
        %705 = vmatpush1.xpose.msra.mxu0 0.0
        %706 = vmatprep.subr.mxu0 0.0
        %707 = vmatpush1.xpose.msra.mxu0 0.0
        %708 = vmatprep.subr.mxu0 0.0
        %709 = vmatpush1.xpose.msra.mxu0 0.0
        %710 = vmatprep.subr.mxu0 0.0
        %711 = vmatpush1.xpose.msra.mxu0 0.0
        %712 = vmatprep.subr.mxu0 0.0
        %713 = vmatpush1.xpose.msra.mxu0 0.0
        %714 = vmatprep.subr.mxu0 0.0
        %715 = vmatpush1.xpose.msra.mxu0 0.0
        %716 = vmatprep.subr.mxu0 0.0
        %717 = vmatpush1.xpose.msra.mxu0 0.0
        %718 = vmatprep.subr.mxu0 0.0
        %719 = vmatpush1.xpose.msra.mxu0 0.0
        %720 = vmatprep.subr.mxu0 0.0
        %721 = vmatpush1.xpose.msra.mxu0 0.0
        %722 = vmatprep.subr.mxu0 0.0
        %723 = vmatpush1.xpose.msra.mxu0 0.0
        %724 = vmatprep.subr.mxu0 0.0
        %725 = vmatpush1.xpose.msra.mxu0 0.0
        %726 = vmatprep.subr.mxu0 0.0
        %727 = vmatpush1.xpose.msra.mxu0 0.0
        %728 = vmatprep.subr.mxu0 0.0
        %729 = vmatpush1.xpose.msra.mxu0 0.0
        %730 = vmatprep.subr.mxu0 0.0
        %731 = vmatpush1.xpose.msra.mxu0 0.0
        %732 = vmatprep.subr.mxu0 0.0
        %733 = vmatpush1.xpose.msra.mxu0 0.0
        %734 = vmatprep.subr.mxu0 0.0
        %735 = vmatpush1.xpose.msra.mxu0 0.0
        %736 = vmatprep.subr.mxu0 0.0
        %737 = vmatpush1.xpose.msra.mxu0 0.0
        %738 = vmatprep.subr.mxu0 0.0
        %739 = vmatpush1.xpose.msra.mxu0 0.0
        %740 = vmatprep.subr.mxu0 0.0
        %741 = vmatpush1.xpose.msra.mxu0 0.0
        %742 = vmatprep.subr.mxu0 0.0
        %743 = vmatpush1.xpose.msra.mxu0 0.0
        %744 = vmatprep.subr.mxu0 0.0
        %745 = vmatpush1.xpose.msra.mxu0 0.0
        %746 = vmatprep.subr.mxu0 0.0
        %747 = vmatpush1.xpose.msra.mxu0 0.0
        %748 = vmatprep.subr.mxu0 0.0
        %749 = vmatpush1.xpose.msra.mxu0 0.0
        %750 = vmatprep.subr.mxu0 0.0
        %751 = vmatpush1.xpose.msra.mxu0 0.0
        %752 = vmatprep.subr.mxu0 0.0
        %753 = vmatpush1.xpose.msra.mxu0 0.0
        %754 = vmatprep.subr.mxu0 0.0
        %755 = vmatpush1.xpose.msra.mxu0 0.0
        %756 = vmatprep.subr.mxu0 0.0
        %757 = vmatpush1.xpose.msra.mxu0 0.0
        %758 = vmatprep.subr.mxu0 0.0
        %759 = vmatpush1.xpose.msra.mxu0 0.0
        %760 = vmatprep.subr.mxu0 0.0
        %761 = vmatpush1.xpose.msra.mxu0 0.0
        %762 = vmatprep.subr.mxu0 0.0
        %763 = vmatpush1.xpose.msra.mxu0 0.0
        %764 = vmatprep.mubr.f32.mxu0 0.0
        %765 = vmatmul.mubr.f32.gmra.mrb[0].mxu0 %v696
        %v766 = vpop.f32.mrb[0].mxu0
        %v767 = vadd.f32 0.0, %v766
        %v768 = vpop.f32.mrb[0].mxu0
        %769 = vdwg.mxu0
        %v770 = vsel %vm358, %v767, -inf
        %771 = vmax.xlane.f32.xlu0 %v770
        %v772 = vpop.xlane.xlu0 %771
        %v773 = vsub.f32 %v767, %v772
        %v774 = vmul.f32 %v773, 1.442695
        %v775 = vpow.pop %v774
        %v776 = vsel %vm358, %v775, 0.0
        %777 = vadd.xlane.f32.xlu0 %v776
        %v778 = vpop.xlane.xlu0 %777
        %v779 = vrcp.pop %v778
        %v780 = vmul.f32 %v775, %v779
        %781 = vrot.lane.b32.xlu0 %v352, 48
        %v782 = vpop.permute.xlu0 %781
        %v785 = vsel %vm358, %v780, 0
        %787 = vmatprep.subr.mxu0 0.0
        %788 = vmatpush1.msra.mxu0 %v782
        %789 = vmatprep.subr.mxu0 0.0
        %790 = vmatpush1.msra.mxu0 0.0
        %791 = vmatprep.subr.mxu0 0.0
        %792 = vmatpush1.msra.mxu0 0.0
        %793 = vmatprep.subr.mxu0 0.0
        %794 = vmatpush1.msra.mxu0 0.0
        %795 = vmatprep.subr.mxu0 0.0
        %796 = vmatpush1.msra.mxu0 0.0
        %797 = vmatprep.subr.mxu0 0.0
        %798 = vmatpush1.msra.mxu0 0.0
        %799 = vmatprep.subr.mxu0 0.0
        %800 = vmatpush1.msra.mxu0 0.0
        %801 = vmatprep.subr.mxu0 0.0
        %802 = vmatpush1.msra.mxu0 0.0
        %803 = vmatprep.subr.mxu0 0.0
        %804 = vmatpush1.msra.mxu0 0.0
        %805 = vmatprep.subr.mxu0 0.0
        %806 = vmatpush1.msra.mxu0 0.0
        %807 = vmatprep.subr.mxu0 0.0
        %808 = vmatpush1.msra.mxu0 0.0
        %809 = vmatprep.subr.mxu0 0.0
        %810 = vmatpush1.msra.mxu0 0.0
        %811 = vmatprep.subr.mxu0 0.0
        %812 = vmatpush1.msra.mxu0 0.0
        %813 = vmatprep.subr.mxu0 0.0
        %814 = vmatpush1.msra.mxu0 0.0
        %815 = vmatprep.subr.mxu0 0.0
        %816 = vmatpush1.msra.mxu0 0.0
        %817 = vmatprep.subr.mxu0 0.0
        %818 = vmatpush1.msra.mxu0 0.0
        %819 = vmatprep.subr.mxu0 0.0
        %820 = vmatpush1.msra.mxu0 0.0
        %821 = vmatprep.subr.mxu0 0.0
        %822 = vmatpush1.msra.mxu0 0.0
        %823 = vmatprep.subr.mxu0 0.0
        %824 = vmatpush1.msra.mxu0 0.0
        %825 = vmatprep.subr.mxu0 0.0
        %826 = vmatpush1.msra.mxu0 0.0
        %827 = vmatprep.subr.mxu0 0.0
        %828 = vmatpush1.msra.mxu0 0.0
        %829 = vmatprep.subr.mxu0 0.0
        %830 = vmatpush1.msra.mxu0 0.0
        %831 = vmatprep.subr.mxu0 0.0
        %832 = vmatpush1.msra.mxu0 0.0
        %833 = vmatprep.subr.mxu0 0.0
        %834 = vmatpush1.msra.mxu0 0.0
        %835 = vmatprep.subr.mxu0 0.0
        %836 = vmatpush1.msra.mxu0 0.0
        %837 = vmatprep.subr.mxu0 0.0
        %838 = vmatpush1.msra.mxu0 0.0
        %839 = vmatprep.subr.mxu0 0.0
        %840 = vmatpush1.msra.mxu0 0.0
        %841 = vmatprep.subr.mxu0 0.0
        %842 = vmatpush1.msra.mxu0 0.0
        %843 = vmatprep.subr.mxu0 0.0
        %844 = vmatpush1.msra.mxu0 0.0
        %845 = vmatprep.subr.mxu0 0.0
        %846 = vmatpush1.msra.mxu0 0.0
        %847 = vmatprep.subr.mxu0 0.0
        %848 = vmatpush1.msra.mxu0 0.0
        %849 = vmatprep.subr.mxu0 0.0
        %850 = vmatpush1.msra.mxu0 0.0
        %851 = vmatprep.mubr.f32.mxu0 0.0
        %852 = vmatmul.mubr.f32.gmra.mrb[0].mxu0 %v785
        %v853 = vpop.f32.mrb[0].mxu0
        %v854 = vadd.f32 0.0, %v853
        %v855 = vpop.f32.mrb[0].mxu0
        %856 = vdwg.mxu0
        %858 = vrot.lane.b32.xlu0 %v854, 16
        %v859 = vpop.permute.xlu0 %858
        %vm861 = vcmask 195712
        %862 = vst.msk [vmem:[#allocation2] sm:$0xff] %vm861, %v859
        %863 = vrot.lane.b32.xlu0 %v352, 104
        %v864 = vpop.permute.xlu0 %863
        %865 = vrot.lane.b32.xlu0 %v352, 72
        %v866 = vpop.permute.xlu0 %865
        %v867 = vsel %vm358, %v864, 0
        %v869 = vsel %vm358, %v866, 0
        %871 = vmatprep.subr.mxu0 0.0
        %872 = vmatpush1.xpose.msra.mxu0 %v869
        %873 = vmatprep.subr.mxu0 0.0
        %874 = vmatpush1.xpose.msra.mxu0 0.0
        %875 = vmatprep.subr.mxu0 0.0
        %876 = vmatpush1.xpose.msra.mxu0 0.0
        %877 = vmatprep.subr.mxu0 0.0
        %878 = vmatpush1.xpose.msra.mxu0 0.0
        %879 = vmatprep.subr.mxu0 0.0
        %880 = vmatpush1.xpose.msra.mxu0 0.0
        %881 = vmatprep.subr.mxu0 0.0
        %882 = vmatpush1.xpose.msra.mxu0 0.0
        %883 = vmatprep.subr.mxu0 0.0
        %884 = vmatpush1.xpose.msra.mxu0 0.0
        %885 = vmatprep.subr.mxu0 0.0
        %886 = vmatpush1.xpose.msra.mxu0 0.0
        %887 = vmatprep.subr.mxu0 0.0
        %888 = vmatpush1.xpose.msra.mxu0 0.0
        %889 = vmatprep.subr.mxu0 0.0
        %890 = vmatpush1.xpose.msra.mxu0 0.0
        %891 = vmatprep.subr.mxu0 0.0
        %892 = vmatpush1.xpose.msra.mxu0 0.0
        %893 = vmatprep.subr.mxu0 0.0
        %894 = vmatpush1.xpose.msra.mxu0 0.0
        %895 = vmatprep.subr.mxu0 0.0
        %896 = vmatpush1.xpose.msra.mxu0 0.0
        %897 = vmatprep.subr.mxu0 0.0
        %898 = vmatpush1.xpose.msra.mxu0 0.0
        %899 = vmatprep.subr.mxu0 0.0
        %900 = vmatpush1.xpose.msra.mxu0 0.0
        %901 = vmatprep.subr.mxu0 0.0
        %902 = vmatpush1.xpose.msra.mxu0 0.0
        %903 = vmatprep.subr.mxu0 0.0
        %904 = vmatpush1.xpose.msra.mxu0 0.0
        %905 = vmatprep.subr.mxu0 0.0
        %906 = vmatpush1.xpose.msra.mxu0 0.0
        %907 = vmatprep.subr.mxu0 0.0
        %908 = vmatpush1.xpose.msra.mxu0 0.0
        %909 = vmatprep.subr.mxu0 0.0
        %910 = vmatpush1.xpose.msra.mxu0 0.0
        %911 = vmatprep.subr.mxu0 0.0
        %912 = vmatpush1.xpose.msra.mxu0 0.0
        %913 = vmatprep.subr.mxu0 0.0
        %914 = vmatpush1.xpose.msra.mxu0 0.0
        %915 = vmatprep.subr.mxu0 0.0
        %916 = vmatpush1.xpose.msra.mxu0 0.0
        %917 = vmatprep.subr.mxu0 0.0
        %918 = vmatpush1.xpose.msra.mxu0 0.0
        %919 = vmatprep.subr.mxu0 0.0
        %920 = vmatpush1.xpose.msra.mxu0 0.0
        %921 = vmatprep.subr.mxu0 0.0
        %922 = vmatpush1.xpose.msra.mxu0 0.0
        %923 = vmatprep.subr.mxu0 0.0
        %924 = vmatpush1.xpose.msra.mxu0 0.0
        %925 = vmatprep.subr.mxu0 0.0
        %926 = vmatpush1.xpose.msra.mxu0 0.0
        %927 = vmatprep.subr.mxu0 0.0
        %928 = vmatpush1.xpose.msra.mxu0 0.0
        %929 = vmatprep.subr.mxu0 0.0
        %930 = vmatpush1.xpose.msra.mxu0 0.0
        %931 = vmatprep.subr.mxu0 0.0
        %932 = vmatpush1.xpose.msra.mxu0 0.0
        %933 = vmatprep.subr.mxu0 0.0
        %934 = vmatpush1.xpose.msra.mxu0 0.0
        %935 = vmatprep.mubr.f32.mxu0 0.0
        %936 = vmatmul.mubr.f32.gmra.mrb[0].mxu0 %v867
        %v937 = vpop.f32.mrb[0].mxu0
        %v938 = vadd.f32 0.0, %v937
        %v939 = vpop.f32.mrb[0].mxu0
        %940 = vdwg.mxu0
        %v941 = vsel %vm358, %v938, -inf
        %942 = vmax.xlane.f32.xlu0 %v941
        %v943 = vpop.xlane.xlu0 %942
        %v944 = vsub.f32 %v938, %v943
        %v945 = vmul.f32 %v944, 1.442695
        %v946 = vpow.pop %v945
        %v947 = vsel %vm358, %v946, 0.0
        %948 = vadd.xlane.f32.xlu0 %v947
        %v949 = vpop.xlane.xlu0 %948
        %v950 = vrcp.pop %v949
        %v951 = vmul.f32 %v946, %v950
        %952 = vrot.lane.b32.xlu0 %v352, 40
        %v953 = vpop.permute.xlu0 %952
        %v956 = vsel %vm358, %v951, 0
        %958 = vmatprep.subr.mxu0 0.0
        %959 = vmatpush1.msra.mxu0 %v953
        %960 = vmatprep.subr.mxu0 0.0
        %961 = vmatpush1.msra.mxu0 0.0
        %962 = vmatprep.subr.mxu0 0.0
        %963 = vmatpush1.msra.mxu0 0.0
        %964 = vmatprep.subr.mxu0 0.0
        %965 = vmatpush1.msra.mxu0 0.0
        %966 = vmatprep.subr.mxu0 0.0
        %967 = vmatpush1.msra.mxu0 0.0
        %968 = vmatprep.subr.mxu0 0.0
        %969 = vmatpush1.msra.mxu0 0.0
        %970 = vmatprep.subr.mxu0 0.0
        %971 = vmatpush1.msra.mxu0 0.0
        %972 = vmatprep.subr.mxu0 0.0
        %973 = vmatpush1.msra.mxu0 0.0
        %974 = vmatprep.subr.mxu0 0.0
        %975 = vmatpush1.msra.mxu0 0.0
        %976 = vmatprep.subr.mxu0 0.0
        %977 = vmatpush1.msra.mxu0 0.0
        %978 = vmatprep.subr.mxu0 0.0
        %979 = vmatpush1.msra.mxu0 0.0
        %980 = vmatprep.subr.mxu0 0.0
        %981 = vmatpush1.msra.mxu0 0.0
        %982 = vmatprep.subr.mxu0 0.0
        %983 = vmatpush1.msra.mxu0 0.0
        %984 = vmatprep.subr.mxu0 0.0
        %985 = vmatpush1.msra.mxu0 0.0
        %986 = vmatprep.subr.mxu0 0.0
        %987 = vmatpush1.msra.mxu0 0.0
        %988 = vmatprep.subr.mxu0 0.0
        %989 = vmatpush1.msra.mxu0 0.0
        %990 = vmatprep.subr.mxu0 0.0
        %991 = vmatpush1.msra.mxu0 0.0
        %992 = vmatprep.subr.mxu0 0.0
        %993 = vmatpush1.msra.mxu0 0.0
        %994 = vmatprep.subr.mxu0 0.0
        %995 = vmatpush1.msra.mxu0 0.0
        %996 = vmatprep.subr.mxu0 0.0
        %997 = vmatpush1.msra.mxu0 0.0
        %998 = vmatprep.subr.mxu0 0.0
        %999 = vmatpush1.msra.mxu0 0.0
        %1000 = vmatprep.subr.mxu0 0.0
        %1001 = vmatpush1.msra.mxu0 0.0
        %1002 = vmatprep.subr.mxu0 0.0
        %1003 = vmatpush1.msra.mxu0 0.0
        %1004 = vmatprep.subr.mxu0 0.0
        %1005 = vmatpush1.msra.mxu0 0.0
        %1006 = vmatprep.subr.mxu0 0.0
        %1007 = vmatpush1.msra.mxu0 0.0
        %1008 = vmatprep.subr.mxu0 0.0
        %1009 = vmatpush1.msra.mxu0 0.0
        %1010 = vmatprep.subr.mxu0 0.0
        %1011 = vmatpush1.msra.mxu0 0.0
        %1012 = vmatprep.subr.mxu0 0.0
        %1013 = vmatpush1.msra.mxu0 0.0
        %1014 = vmatprep.subr.mxu0 0.0
        %1015 = vmatpush1.msra.mxu0 0.0
        %1016 = vmatprep.subr.mxu0 0.0
        %1017 = vmatpush1.msra.mxu0 0.0
        %1018 = vmatprep.subr.mxu0 0.0
        %1019 = vmatpush1.msra.mxu0 0.0
        %1020 = vmatprep.subr.mxu0 0.0
        %1021 = vmatpush1.msra.mxu0 0.0
        %1022 = vmatprep.mubr.f32.mxu0 0.0
        %1023 = vmatmul.mubr.f32.gmra.mrb[0].mxu0 %v956
        %v1024 = vpop.f32.mrb[0].mxu0
        %v1025 = vadd.f32 0.0, %v1024
        %v1026 = vpop.f32.mrb[0].mxu0
        %1027 = vdwg.mxu0
        %1029 = vrot.lane.b32.xlu0 %v1025, 24
        %v1030 = vpop.permute.xlu0 %1029
        %vm1032 = vcmask 261312
        %1033 = vst.msk [vmem:[#allocation2] sm:$0xff] %vm1032, %v1030
        %v1034 = vld [vmem:[#allocation2] sm:$0xff]
        %v1035 = vld [vmem:[#allocation8] sm:$0xff]
        %v1036 = vld [vmem:[#allocation8 + $0x8] sm:$0xff]
        %v1037 = vld [vmem:[#allocation8 + $0x10] sm:$0xff]
        %v1038 = vld [vmem:[#allocation8 + $0x18] sm:$0xff]
        %v1039 = vld [vmem:[%s4] sm:$0x1]
        %v1041 = vlaneseq
        %v1042 = vshrl.u32 %v1041, 7
        %v1043 = vsub.s32 0, %v1042
        %v1044 = vrot.slane %v1039, %v1043
        %v1047 = vsel %vm281, %v1034, 0
        %1049 = vmatprep.subr.mxu0 0.0
        %1050 = vmatpush1.msra.mxu0 %v1035
        %1051 = vmatprep.subr.mxu0 0.0
        %1052 = vmatpush1.msra.mxu0 %v1036
        %1053 = vmatprep.subr.mxu0 0.0
        %1054 = vmatpush1.msra.mxu0 %v1037
        %1055 = vmatprep.subr.mxu0 0.0
        %1056 = vmatpush1.msra.mxu0 %v1038
        %1057 = vmatprep.subr.mxu0 0.0
        %1058 = vmatpush1.msra.mxu0 0.0
        %1059 = vmatprep.subr.mxu0 0.0
        %1060 = vmatpush1.msra.mxu0 0.0
        %1061 = vmatprep.subr.mxu0 0.0
        %1062 = vmatpush1.msra.mxu0 0.0
        %1063 = vmatprep.subr.mxu0 0.0
        %1064 = vmatpush1.msra.mxu0 0.0
        %1065 = vmatprep.subr.mxu0 0.0
        %1066 = vmatpush1.msra.mxu0 0.0
        %1067 = vmatprep.subr.mxu0 0.0
        %1068 = vmatpush1.msra.mxu0 0.0
        %1069 = vmatprep.subr.mxu0 0.0
        %1070 = vmatpush1.msra.mxu0 0.0
        %1071 = vmatprep.subr.mxu0 0.0
        %1072 = vmatpush1.msra.mxu0 0.0
        %1073 = vmatprep.subr.mxu0 0.0
        %1074 = vmatpush1.msra.mxu0 0.0
        %1075 = vmatprep.subr.mxu0 0.0
        %1076 = vmatpush1.msra.mxu0 0.0
        %1077 = vmatprep.subr.mxu0 0.0
        %1078 = vmatpush1.msra.mxu0 0.0
        %1079 = vmatprep.subr.mxu0 0.0
        %1080 = vmatpush1.msra.mxu0 0.0
        %1081 = vmatprep.subr.mxu0 0.0
        %1082 = vmatpush1.msra.mxu0 0.0
        %1083 = vmatprep.subr.mxu0 0.0
        %1084 = vmatpush1.msra.mxu0 0.0
        %1085 = vmatprep.subr.mxu0 0.0
        %1086 = vmatpush1.msra.mxu0 0.0
        %1087 = vmatprep.subr.mxu0 0.0
        %1088 = vmatpush1.msra.mxu0 0.0
        %1089 = vmatprep.subr.mxu0 0.0
        %1090 = vmatpush1.msra.mxu0 0.0
        %1091 = vmatprep.subr.mxu0 0.0
        %1092 = vmatpush1.msra.mxu0 0.0
        %1093 = vmatprep.subr.mxu0 0.0
        %1094 = vmatpush1.msra.mxu0 0.0
        %1095 = vmatprep.subr.mxu0 0.0
        %1096 = vmatpush1.msra.mxu0 0.0
        %1097 = vmatprep.subr.mxu0 0.0
        %1098 = vmatpush1.msra.mxu0 0.0
        %1099 = vmatprep.subr.mxu0 0.0
        %1100 = vmatpush1.msra.mxu0 0.0
        %1101 = vmatprep.subr.mxu0 0.0
        %1102 = vmatpush1.msra.mxu0 0.0
        %1103 = vmatprep.subr.mxu0 0.0
        %1104 = vmatpush1.msra.mxu0 0.0
        %1105 = vmatprep.subr.mxu0 0.0
        %1106 = vmatpush1.msra.mxu0 0.0
        %1107 = vmatprep.subr.mxu0 0.0
        %1108 = vmatpush1.msra.mxu0 0.0
        %1109 = vmatprep.subr.mxu0 0.0
        %1110 = vmatpush1.msra.mxu0 0.0
        %1111 = vmatprep.subr.mxu0 0.0
        %1112 = vmatpush1.msra.mxu0 0.0
        %1113 = vmatprep.mubr.f32.mxu0 0.0
        %1114 = vmatmul.mubr.f32.gmra.mrb[0].mxu0 %v1047
        %v1115 = vpop.f32.mrb[0].mxu0
        %v1116 = vadd.f32 %v1044, %v1115
        %v1117 = vpop.f32.mrb[0].mxu0
        %1118 = vdwg.mxu0
        %1119 = vst.msk [vmem:[%s268] sm:$0xff] %vm281, %v1116
        %s1120 = sand.u32 %s141, 1
        %s1121 = scalar_lea.sflag [#allocation5], %s1120
        %s1122 = sand.u32 %s141, 1
        %s1123 = smul.addr %s1122, 8
        %s1124 = scalar_lea.vmem [#allocation9], %s1123
        // Predicated region
        $region53: #{tpu_custom_call.1} parent=39 // pred_check
          %p1125 = pneg %p151
        $region54: #{tpu_custom_call.1} parent=39 // pred_check_branch
          %1127 = sbr.rel (%p1125) target = $region56
        $region55: #{tpu_custom_call.1} parent=39 // pred_region
          %s1129 = ssub.s32 128, 128
          %1130 = vsyncadd %s1121, %s1129
          %s1131 = smul.addr %s23, 128
          %s1132 = scalar_lea.hbm %s5, %s1131
          %s1134 = sshll.u32 %s1124, 4
          %s1135 = int_to_ptr.vmem [resolvable:$true] %s1134
          %1137 = dma.vmem_to_hbm [thread:$0]  %s1135, 128, %s1132, %s1121
        $region56: #{tpu_custom_call.1} parent=39 // pred_fallthru
          _
      $region40: #{tpu_custom_call.1} parent=5 // pred_fallthru
        _
      %p1138 = scmp.le.s32.totalorder 2, %s18
      // Predicated region
      $region57: #{tpu_custom_call.1} parent=5 // pred_check
        %p1139 = pneg %p1138
      $region58: #{tpu_custom_call.1} parent=5 // pred_check_branch
        %1141 = sbr.rel (%p1139) target = $region60
      $region59: #{tpu_custom_call.1} parent=5 // pred_region
        %s1142 = ssub.s32 %s18, 2
        // Predicated region
        $region61: #{tpu_custom_call.1} parent=59 // pred_check
          %p1143 = pneg %p157
        $region62: #{tpu_custom_call.1} parent=59 // pred_check_branch
          %1145 = sbr.rel (%p1143) target = $region64
        $region63: #{tpu_custom_call.1} parent=59 // pred_region
          %s1146 = sand.u32 %s142, 1
          %s1147 = scalar_lea.sflag [#allocation5], %s1146
          %s1148 = sand.u32 %s142, 1
          %s1149 = smul.addr %s1148, 8
          %s1150 = scalar_lea.vmem [#allocation9], %s1149
          %1151 = dma.done %s1147, 128
        $region64: #{tpu_custom_call.1} parent=59 // pred_fallthru
          _
      $region60: #{tpu_custom_call.1} parent=5 // pred_fallthru
        _
    $region6: #{tpu_custom_call.1} parent=1 // loop_footer
      %s22 = sadd.s32 1, %s18
    $region7: #{tpu_custom_call.1} parent=1 // loop_footer_branch
      %17 = sbr.rel target = $region3
    $region8: #{tpu_custom_call.1} parent=1 // loop_exit
      _
    %1152 = vsyncpa [#allocation4], 1
    %s1153 = scalar_lea.sflag [#allocation4], 1
    %1154 = vsyncpa %s1153, 1
    %1155 = vsyncpa [#allocation7], 1
    %1156 = vsyncpa [#allocation5], 1
    %s1157 = scalar_lea.sflag [#allocation5], 1
    %1158 = vsyncpa %s1157, 1

</llo_original>
